<compile_context>
chip_gen: v6e
topology: v6e:2x2x1
jax: 0.10.0
libtpu: 0.0.40
codegen_flags: <defaults>
</compile_context>

<pallas_src>
import jax
import jax.numpy as jnp
from jax.experimental import pallas as pl
from jax.experimental.pallas import tpu as pltpu

_LANES = 128                           # vreg lane width
_TARGET_BLOCK_BYTES = 2 * 1024 * 1024  # ~2 MiB/buffer: v6e copy plateau, v7x-safe


def _copy_kernel(x_ref, o_ref):
    # Elementwise identity on the current VMEM tile.
    o_ref[...] = x_ref[...]


def conv1d_adapter(x, output_size: int, is_in: bool):
    """Faithful _Conv1dAdapter.forward: a pure view.

    Under XLA a reshape of a contiguous array is metadata-only, so no Pallas
    kernel is used on the hot path (top item of the perf review).
    """
    total = x.size
    assert total % output_size == 0, "numel must be divisible by outputSize"
    n = total // output_size
    if is_in:
        return jnp.reshape(x, (n, 1, output_size))
    return jnp.reshape(x, (n, output_size))


def conv1d_adapter_copy(x, output_size: int, is_in: bool):
    """Same semantics, but materializes a physical copy via a Pallas kernel.

    Only useful when an explicit copy is required; layout/tiling follows the
    perf review (lane-dense last dim, tiled parallel grid, ~2 MiB blocks).
    """
    total = x.size
    assert total % output_size == 0, "numel must be divisible by outputSize"
    n = total // output_size
    dtype = x.dtype
    itemsize = jnp.dtype(dtype).itemsize

    if total % _LANES == 0:
        # Lane-dense slab: last dim = 128 -> full-width stores.
        rows, cols = total // _LANES, _LANES
    else:
        # Fallback: single full-array block (full dims always satisfy the
        # (8,128) tiling rule, regardless of output_size).
        rows, cols = n, output_size

    x2d = jnp.reshape(x, (rows, cols))

    # Rows per block: ~2 MiB per buffer, rounded to a multiple of 8 sublanes;
    # a block equal to the full row extent is always legal.
    tr = min(rows, max(8, _TARGET_BLOCK_BYTES // (cols * itemsize)))
    if tr < rows:
        tr = max(8, (tr // 8) * 8)
    grid = (pl.cdiv(rows, tr),)

    out2d = pl.pallas_call(
        _copy_kernel,
        out_shape=jax.ShapeDtypeStruct((rows, cols), dtype),
        grid=grid,
        in_specs=[pl.BlockSpec((tr, cols), lambda i: (i, 0))],
        out_specs=pl.BlockSpec((tr, cols), lambda i: (i, 0)),
        compiler_params=pltpu.CompilerParams(
            dimension_semantics=("parallel",),  # v7x: both TCs split the rows
        ),
        # NOTE: input_output_aliases={0: 0} would elide the duplicate HBM
        # allocation (helps v5e writeback pressure) but requires the caller to
        # donate x; omitted so the demo stays side-effect free.
    )(x2d)

    if is_in:
        return jnp.reshape(out2d, (n, 1, output_size))
    return jnp.reshape(out2d, (n, output_size))


if __name__ == "__main__":
    key = jax.random.PRNGKey(0)
    output_size = 16
    # Input consistent with a conv-stack adapter: (batch=2, channels=4, length=16)
    x = jax.random.normal(key, (2, 4, 16), dtype=jnp.float32)
    n = x.size // output_size

    # ---- Primary (recommended) path: pure reshape, no kernel. ----
    out_in = jax.block_until_ready(conv1d_adapter(x, output_size, is_in=True))
    out_out = jax.block_until_ready(conv1d_adapter(x, output_size, is_in=False))
    assert out_in.shape == (n, 1, output_size)
    assert out_out.shape == (n, output_size)
    assert jnp.allclose(out_in.reshape(-1), x.reshape(-1))
    assert jnp.allclose(out_out.reshape(-1), x.reshape(-1))

    # ---- Pallas copy path (lane-dense, tiled, parallel grid), run once. ----
    k_in = jax.block_until_ready(conv1d_adapter_copy(x, output_size, is_in=True))
    k_out = jax.block_until_ready(conv1d_adapter_copy(x, output_size, is_in=False))
    assert k_in.shape == (n, 1, output_size)
    assert k_out.shape == (n, output_size)
    assert jnp.allclose(k_in.reshape(-1), x.reshape(-1))
    assert jnp.allclose(k_out.reshape(-1), x.reshape(-1))

    print("KERNEL_OK")
</pallas_src>

<mosaic_0001>
module attributes {stable_mosaic.version = 11 : i64} {
  func.func @_copy_kernel(%arg0: i32, %arg1: memref<1x128xf32, #tpu.memory_space<vmem>>, %arg2: memref<1x128xf32, #tpu.memory_space<vmem>>) attributes {dimension_semantics = [#tpu.dimension_semantics<parallel>], iteration_bounds = array<i64: 1>, scalar_prefetch = 0 : i64, scratch_operands = 0 : i64, tpu.core_type = #tpu.core_type<tc>, window_params = [{transform_indices = @transform_0, window_bounds = array<i64: 1, 128>}, {transform_indices = @transform_1, window_bounds = array<i64: 1, 128>}]} {
    %c0 = arith.constant 0 : index
    %c0_0 = arith.constant 0 : index
    %0 = vector.load %arg1[%c0, %c0_0] : memref<1x128xf32, #tpu.memory_space<vmem>>, vector<1x128xf32>
    %c0_1 = arith.constant 0 : index
    %c0_2 = arith.constant 0 : index
    %1 = vector.load %arg2[%c0_1, %c0_2] : memref<1x128xf32, #tpu.memory_space<vmem>>, vector<1x128xf32>
    tpu.vector_store %arg2[%c0_1, %c0_2], %0 {strides = array<i32>} : memref<1x128xf32, #tpu.memory_space<vmem>>, vector<1x128xf32>,
    return
  }
  func.func @transform_0(%arg0: i32) -> (i32, i32) {
    %c0_i32 = arith.constant 0 : i32
    %c0_i32_0 = arith.constant 0 : i32
    return %arg0, %c0_i32 : i32, i32
  }
  func.func @transform_1(%arg0: i32) -> (i32, i32) {
    %c0_i32 = arith.constant 0 : i32
    %c0_i32_0 = arith.constant 0 : i32
    return %arg0, %c0_i32 : i32, i32
  }
}

</mosaic_0001>

<llo_original>
// kernel: tpu_custom_call.1
$region0: #{tpu_custom_call.1}
  #allocation0 [shape = 'u32[]', space=smem, size = 0x4, offset = 0x4, fixed_abs, tag = 'smem constant byte address 0x4 - core index']
  #allocation1 [shape = 'u32[144,128]{1,0:T(1,128)}', space=vmem, size = 0x12000, scoped, tag = 'internal scratch']
  %s0 = inlined_call_operand.hbm [shape: f32[1,128], index: 0, kind: input, shape index: {}]
  %s1 = inlined_call_operand.hbm [shape: f32[1,128], index: 1, kind: output, shape index: {}]
  %s2 = sld [smem:[#allocation0]]
  $region18: #{tpu_custom_call.1} parent=0
    _
  %s4 = ssub.s32 1, %s2
  %s5 = scalar_select 0, %s4, %s2
  $region1: #{tpu_custom_call.1} parent=0
    #allocation2 [shape = 'u8[512]{0}', space=vmem, size = 0x400, scoped, tag = 'input window, operand 0, single buffered']
    #allocation3 [shape = 's32[1]{0}', space=sflag, size = 0x4, scoped, tag = 'scoped memory for tpu_custom_call.1']
    #allocation4 [shape = 's32[1]{0}', space=sflag, size = 0x4, scoped, tag = 'scoped memory for tpu_custom_call.1']
    #allocation5 [shape = 'u8[512]{0}', space=vmem, size = 0x400, scoped, tag = 'output window, operand 0, single buffered']
    %6 = vsyncpa [#allocation3], 0
    %7 = vsyncpa [#allocation4], 0
    // Predicated region
    $region2: #{tpu_custom_call.1} parent=1 // pred_check
      _
    $region3: #{tpu_custom_call.1} parent=1 // pred_check_branch
      %9 = sbr.rel (0) target = $region5
    $region4: #{tpu_custom_call.1} parent=1 // pred_region
      %s11 = ssub.s32 16, 16
      %12 = vsyncadd [#allocation3], %s11
      %s14 = sshll.u32 [#allocation2], 4
      %s15 = int_to_ptr.vmem [resolvable:$true] %s14
      %17 = dma.hbm_to_vmem [thread:$0]  %s0, 16, %s15, [#allocation3]
    $region5: #{tpu_custom_call.1} parent=1 // pred_fallthru
      _
    // Predicated region
    $region6: #{tpu_custom_call.1} parent=1 // pred_check
      _
    $region7: #{tpu_custom_call.1} parent=1 // pred_check_branch
      %19 = sbr.rel (0) target = $region9
    $region8: #{tpu_custom_call.1} parent=1 // pred_region
      %20 = dma.done [#allocation3], 16
    $region9: #{tpu_custom_call.1} parent=1 // pred_fallthru
      _
    %v21 = vld [vmem:[#allocation2] sm:$0x1]
    %22 = vst [vmem:[#allocation5] sm:$0x1] %v21
    // Predicated region
    $region10: #{tpu_custom_call.1} parent=1 // pred_check
      _
    $region11: #{tpu_custom_call.1} parent=1 // pred_check_branch
      %24 = sbr.rel (0) target = $region13
    $region12: #{tpu_custom_call.1} parent=1 // pred_region
      %s26 = ssub.s32 16, 16
      %27 = vsyncadd [#allocation4], %s26
      %s29 = sshll.u32 [#allocation5], 4
      %s30 = int_to_ptr.vmem [resolvable:$true] %s29
      %32 = dma.vmem_to_hbm [thread:$0]  %s30, 16, %s1, [#allocation4]
    $region13: #{tpu_custom_call.1} parent=1 // pred_fallthru
      _
    // Predicated region
    $region14: #{tpu_custom_call.1} parent=1 // pred_check
      _
    $region15: #{tpu_custom_call.1} parent=1 // pred_check_branch
      %34 = sbr.rel (0) target = $region17
    $region16: #{tpu_custom_call.1} parent=1 // pred_region
      %35 = dma.done [#allocation4], 16
    $region17: #{tpu_custom_call.1} parent=1 // pred_fallthru
      _
    %36 = vsyncpa [#allocation3], 1
    %37 = vsyncpa [#allocation4], 1

</llo_original>
